<compile_context>
chip_gen: v7x
topology: tpu7x:2x2x1
jax: 0.10.0
libtpu: 0.0.40
codegen_flags: <defaults>
</compile_context>

<pallas_src>
import functools

import jax
import jax.numpy as jnp
from jax.experimental import pallas as pl
from jax.experimental.pallas import tpu as pltpu

# ---------------- static config (small, consistent with the module) ----------
BATCH = 2
SEQ = 8
HIDDEN = 32
VOCAB = 64
NUM_FILTERS = 8
FILTER_SIZES = (2, 3, 4)
NUM_LABELS = 4
DROPOUT = 0.1                           # inference -> identity

K_MAX = max(FILTER_SIZES)               # 4
FNK = NUM_FILTERS * len(FILTER_SIZES)   # 24
LANES = 128                             # lane-dense packing width
assert FNK <= LANES and NUM_LABELS <= LANES
assert max(FILTER_SIZES) <= SEQ
# One-hot embedding matmul is only acceptable for a tiny vocab (review item 4).
assert VOCAB <= 512, "use a row-gather embedding for real BERT vocab sizes"

# -------- row layout of the packed f32 parameter slab [PAR_ROWS, 128] ---------
ROW_WCONV = 0                            # K_MAX*H rows, 128 lanes (packed convs)
ROW_WFC = ROW_WCONV + K_MAX * HIDDEN     # 128 rows, 128 lanes (padded FC weight)
ROW_WEMB = ROW_WFC + LANES               # VOCAB rows, lanes 0:H
ROW_POS = ROW_WEMB + VOCAB               # SEQ rows, lanes 0:H
ROW_MASK = ROW_POS + SEQ                 # B*S rows, 128 lanes (valid-pos mask)
ROW_TYPE = ROW_MASK + BATCH * SEQ        # 2 rows, lanes 0:H
ROW_LNG = ROW_TYPE + 2                   # 1 row, lanes 0:H
ROW_LNB = ROW_LNG + 1
ROW_BCONV = ROW_LNB + 1                  # 1 row, 128 lanes
ROW_BFC = ROW_BCONV + 1                  # 1 row, 128 lanes
PAR_ROWS = ((ROW_BFC + 1 + 7) // 8) * 8  # 352


# ------------------------------ Pallas kernel --------------------------------
def _bertcnn_kernel(tok_ref, par_ref, out_ref, *, num_labels):
    """Embedding stub + LayerNorm + fused conv/ReLU/max-pool + FC + softmax."""
    BS = tok_ref.shape[0]                          # B*S
    B = BS // SEQ

    ids = tok_ref[:, 0:1]                          # [BS, 1] int32
    tt_f = tok_ref[:, 1:2].astype(jnp.float32)     # [BS, 1] token types in {0,1}

    # ---- BERT stub: embedding gather as one-hot MXU matmul + LayerNorm ------
    vocab_iota = jax.lax.broadcasted_iota(jnp.int32, (BS, VOCAB), 1)
    one_hot = (vocab_iota == ids).astype(jnp.float32)                 # [BS, V]
    wemb = par_ref[ROW_WEMB:ROW_WEMB + VOCAB, 0:HIDDEN]               # [V, H]
    h = jnp.dot(one_hot, wemb, preferred_element_type=jnp.float32)    # [BS, H]

    temb0 = par_ref[ROW_TYPE:ROW_TYPE + 1, 0:HIDDEN]                  # [1, H]
    temb1 = par_ref[ROW_TYPE + 1:ROW_TYPE + 2, 0:HIDDEN]
    h = h + temb0 * (1.0 - tt_f) + temb1 * tt_f
    pos = par_ref[ROW_POS:ROW_POS + SEQ, 0:HIDDEN]                    # [S, H]
    h = h + jnp.concatenate([pos] * B, axis=0)                        # [BS, H]

    mu = jnp.mean(h, axis=-1, keepdims=True)
    xc = h - mu
    var = jnp.mean(xc * xc, axis=-1, keepdims=True)
    h = xc * jax.lax.rsqrt(var + 1e-12)
    h = (h * par_ref[ROW_LNG:ROW_LNG + 1, 0:HIDDEN]
         + par_ref[ROW_LNB:ROW_LNB + 1, 0:HIDDEN])                    # [BS, H]

    # ---- all convs as K_MAX accumulating MXU matmuls over shifted h ---------
    # h_ext[r + i] supplies conv tap i for output time step r; time steps whose
    # taps wrap past the batch/sequence end are zeroed by the pool mask below,
    # so no per-batch zero padding (and no lane-axis im2col) is needed.
    h_ext = jnp.concatenate(
        [h, jnp.zeros((K_MAX - 1, HIDDEN), jnp.float32)], axis=0)     # [BS+3, H]
    acc = jnp.dot(h, par_ref[ROW_WCONV:ROW_WCONV + HIDDEN, :],
                  preferred_element_type=jnp.float32)                 # [BS, 128]
    for i in range(1, K_MAX):
        acc = acc + jnp.dot(
            h_ext[i:i + BS, :],
            par_ref[ROW_WCONV + i * HIDDEN:ROW_WCONV + (i + 1) * HIDDEN, :],
            preferred_element_type=jnp.float32)

    # bias + ReLU + validity mask (exact because ReLU >= 0) + max-pool over t
    act = jnp.maximum(acc + par_ref[ROW_BCONV:ROW_BCONV + 1, :], 0.0)
    act = act * par_ref[ROW_MASK:ROW_MASK + BS, :]                    # [BS, 128]
    pooled = jnp.max(act.reshape(B, SEQ, LANES), axis=1)              # [B, 128]

    # ---- dropout = identity (inference); FC; masked softmax ----------------
    logits = jnp.dot(pooled, par_ref[ROW_WFC:ROW_WFC + LANES, :],
                     preferred_element_type=jnp.float32)
    logits = logits + par_ref[ROW_BFC:ROW_BFC + 1, :]                 # [B, 128]
    lane = jax.lax.broadcasted_iota(jnp.int32, logits.shape, 1)
    z = jnp.where(lane < num_labels, logits, jnp.float32(-1e30))
    m = jnp.max(z, axis=-1, keepdims=True)
    e = jnp.exp(z - m)
    # approx reciprocal (EUP slot): rows sum to 1 within ~2^-12.
    prob = e * pl.reciprocal(jnp.sum(e, axis=-1, keepdims=True), approx=True)

    # ---- single fused, lane-dense, full-tile store --------------------------
    pad_rows = out_ref.shape[0] - 2 * B
    parts = [logits, prob]
    if pad_rows > 0:
        parts.append(jnp.zeros((pad_rows, LANES), jnp.float32))
    out_ref[...] = jnp.concatenate(parts, axis=0)


# ------------------------------ wrapper ---------------------------------------
def bertcnn_forward(par_slab, inputs):
    """inputs: dict of [B, S] int32 arrays -> (logits [B, L], prob [B, L])."""
    B, S = inputs["input_ids"].shape
    assert (B, S) == (BATCH, SEQ), "packed parameter slab assumes (BATCH, SEQ)"
    BS = B * S
    ids = inputs["input_ids"].reshape(BS).astype(jnp.int32)
    tts = inputs["token_type_ids"].reshape(BS).astype(jnp.int32)
    # TODO(synk): attention_mask only affects the (stubbed) BERT encoder; unused.
    tok_slab = (jnp.zeros((BS, LANES), jnp.int32)
                .at[:, 0].set(ids).at[:, 1].set(tts))

    out_rows = ((2 * B + 7) // 8) * 8    # 8: sublane-padded fused output slab

    flops = int(2 * BS * VOCAB * HIDDEN            # one-hot embedding matmul
                + K_MAX * 2 * BS * HIDDEN * LANES  # accumulating conv matmuls
                + 2 * B * LANES * LANES)           # FC matmul
    transcendentals = int(B * LANES + BS + B)      # exp + rsqrt + reciprocal
    bytes_accessed = int(tok_slab.size * 4 + PAR_ROWS * LANES * 4
                         + out_rows * LANES * 4)

    kernel = functools.partial(_bertcnn_kernel, num_labels=NUM_LABELS)
    fused = pl.pallas_call(
        kernel,
        out_shape=jax.ShapeDtypeStruct((out_rows, LANES), jnp.float32),
        in_specs=[pl.BlockSpec(memory_space=pltpu.MemorySpace.VMEM),
                  pl.BlockSpec(memory_space=pltpu.MemorySpace.VMEM)],
        out_specs=pl.BlockSpec(memory_space=pltpu.MemorySpace.VMEM),
        cost_estimate=pl.CostEstimate(flops=flops,
                                      transcendentals=transcendentals,
                                      bytes_accessed=bytes_accessed),
    )(tok_slab, par_slab)

    logits = fused[:B, :NUM_LABELS]
    prob = fused[B:2 * B, :NUM_LABELS]
    return logits, prob


# --------------------------- parameters (host-side glue) ----------------------
def init_raw_params(key):
    """Torch-layout parameters (single source of truth for kernel + reference)."""
    ks = jax.random.split(key, 7)
    raw = {
        "word_emb": 0.02 * jax.random.normal(ks[0], (VOCAB, HIDDEN), jnp.float32),
        "pos_emb": 0.02 * jax.random.normal(ks[1], (SEQ, HIDDEN), jnp.float32),
        "type_emb": 0.02 * jax.random.normal(ks[2], (2, HIDDEN), jnp.float32),
        "ln_g": jnp.ones((HIDDEN,), jnp.float32),
        "ln_b": jnp.zeros((HIDDEN,), jnp.float32),
        # nn.Conv2d(1, F, (k, H)) weights, torch layout [F, 1, k, H]
        "conv_w": [0.1 * jax.random.normal(ks[3 + j], (NUM_FILTERS, 1, k, HIDDEN),
                                           jnp.float32)
                   for j, k in enumerate(FILTER_SIZES)],
        "conv_b": [jnp.full((NUM_FILTERS,), 0.01, jnp.float32)
                   for _ in FILTER_SIZES],
        # nn.Linear(FNK, L): weight [L, FNK], bias [L]
        "fc_w": 0.1 * jax.random.normal(ks[6], (NUM_LABELS, FNK), jnp.float32),
        "fc_b": jnp.full((NUM_LABELS,), 0.01, jnp.float32),
    }
    return raw


def pack_params(raw):
    """Pack every float parameter into one lane-dense [PAR_ROWS, 128] f32 slab."""
    slab = jnp.zeros((PAR_ROWS, LANES), jnp.float32)
    for j, k in enumerate(FILTER_SIZES):
        w = raw["conv_w"][j]                         # [F, 1, k, H]
        # row i*H + d, col j*F + f  <-  w[f, 0, i, d]; rows for taps i >= k are 0
        wk = jnp.transpose(w[:, 0], (1, 2, 0)).reshape(k * HIDDEN, NUM_FILTERS)
        cols = slice(j * NUM_FILTERS, (j + 1) * NUM_FILTERS)
        slab = slab.at[ROW_WCONV:ROW_WCONV + k * HIDDEN, cols].set(wk)
        slab = slab.at[ROW_BCONV, cols].set(raw["conv_b"][j])
        # valid conv output positions t <= SEQ - k, tiled over batch
        mvalid = (jnp.arange(SEQ) <= SEQ - k).astype(jnp.float32)     # [S]
        mask_col = jnp.tile(mvalid, (BATCH,))                         # [B*S]
        slab = slab.at[ROW_MASK:ROW_MASK + BATCH * SEQ, cols].set(
            jnp.broadcast_to(mask_col[:, None], (BATCH * SEQ, NUM_FILTERS)))
    slab = slab.at[ROW_WFC:ROW_WFC + FNK, 0:NUM_LABELS].set(raw["fc_w"].T)
    slab = slab.at[ROW_BFC, 0:NUM_LABELS].set(raw["fc_b"])
    slab = slab.at[ROW_WEMB:ROW_WEMB + VOCAB, 0:HIDDEN].set(raw["word_emb"])
    slab = slab.at[ROW_POS:ROW_POS + SEQ, 0:HIDDEN].set(raw["pos_emb"])
    slab = slab.at[ROW_TYPE:ROW_TYPE + 2, 0:HIDDEN].set(raw["type_emb"])
    slab = slab.at[ROW_LNG, 0:HIDDEN].set(raw["ln_g"])
    slab = slab.at[ROW_LNB, 0:HIDDEN].set(raw["ln_b"])
    return slab


# --------------------------- pure-JAX reference -------------------------------
def reference_forward(raw, inputs):
    hi = jax.lax.Precision.HIGHEST
    ids = inputs["input_ids"]
    tts = inputs["token_type_ids"]
    h = raw["word_emb"][ids] + raw["type_emb"][tts] + raw["pos_emb"][None, :, :]
    mu = jnp.mean(h, axis=-1, keepdims=True)
    var = jnp.mean((h - mu) ** 2, axis=-1, keepdims=True)
    h = (h - mu) * jax.lax.rsqrt(var + 1e-12) * raw["ln_g"] + raw["ln_b"]
    feats = []
    for j, k in enumerate(FILTER_SIZES):
        w = raw["conv_w"][j][:, 0]                                    # [F, k, H]
        win = jnp.stack([h[:, i:i + SEQ - k + 1, :] for i in range(k)], axis=2)
        conv = jnp.einsum("btkh,fkh->btf", win, w, precision=hi) + raw["conv_b"][j]
        feats.append(jnp.max(jax.nn.relu(conv), axis=1))              # [B, F]
    pooled = jnp.concatenate(feats, axis=1)                           # [B, 3F]
    logits = jnp.dot(pooled, raw["fc_w"].T, precision=hi) + raw["fc_b"]
    prob = jax.nn.softmax(logits, axis=-1)
    return logits, prob


# ----------------------------------- main -------------------------------------
if __name__ == "__main__":
    key = jax.random.PRNGKey(0)
    k_param, k_ids = jax.random.split(key)

    raw_params = init_raw_params(k_param)
    par_slab = pack_params(raw_params)
    inputs = {
        "input_ids": jax.random.randint(k_ids, (BATCH, SEQ), 0, VOCAB, jnp.int32),
        "attention_mask": jnp.ones((BATCH, SEQ), jnp.int32),
        "token_type_ids": jnp.zeros((BATCH, SEQ), jnp.int32),
    }

    logits, prob = jax.jit(bertcnn_forward)(par_slab, inputs)
    jax.block_until_ready((logits, prob))

    ref_logits, ref_prob = reference_forward(raw_params, inputs)

    assert logits.shape == (BATCH, NUM_LABELS)
    assert prob.shape == (BATCH, NUM_LABELS)
    assert bool(jnp.all(jnp.isfinite(logits))) and bool(jnp.all(jnp.isfinite(prob)))
    assert bool(jnp.all(jnp.abs(jnp.sum(prob, axis=-1) - 1.0) < 1e-2))
    # loose tolerances: MXU f32 pass structure + approx softmax reciprocal
    assert float(jnp.max(jnp.abs(logits - ref_logits))) < 3e-2
    assert float(jnp.max(jnp.abs(prob - ref_prob))) < 1e-2
    print("KERNEL_OK")
</pallas_src>

<mosaic_0001>
module attributes {stable_mosaic.version = 11 : i64} {
  func.func @_bertcnn_kernel(%arg0: memref<16x128xi32, #tpu.memory_space<vmem>>, %arg1: memref<352x128xf32, #tpu.memory_space<vmem>>, %arg2: memref<8x128xf32, #tpu.memory_space<vmem>>) attributes {dimension_semantics = [], scalar_prefetch = 0 : i64, scratch_operands = 0 : i64, tpu.core_type = #tpu.core_type<tc>} {
    %c0 = arith.constant 0 : index
    %c0_0 = arith.constant 0 : index
    %0 = vector.load %arg0[%c0, %c0_0] : memref<16x128xi32, #tpu.memory_space<vmem>>, vector<16x1xi32>
    %c0_1 = arith.constant 0 : index
    %c1 = arith.constant 1 : index
    %1 = vector.load %arg0[%c0_1, %c1] : memref<16x128xi32, #tpu.memory_space<vmem>>, vector<16x1xi32>
    %2 = arith.sitofp %1 : vector<16x1xi32> to vector<16x1xf32>
    %3 = tpu.iota {dimensions = array<i32: 1>} : vector<16x64xi32>
    %4 = vector.broadcast %0 : vector<16x1xi32> to vector<16x64xi32>
    %5 = arith.cmpi eq, %3, %4 : vector<16x64xi32>
    %6 = arith.extui %5 : vector<16x64xi1> to vector<16x64xi32>
    %7 = arith.sitofp %6 : vector<16x64xi32> to vector<16x64xf32>
    %c256 = arith.constant 256 : index
    %c0_2 = arith.constant 0 : index
    %8 = vector.load %arg1[%c256, %c0_2] : memref<352x128xf32, #tpu.memory_space<vmem>>, vector<64x32xf32>
    %cst = arith.constant dense<0.000000e+00> : vector<16x32xf32>
    %9 = tpu.matmul %7, %8, %cst {dimension_numbers = #tpu.dot_dimension_numbers<[1], [0], [0], [1], [0, 0, 1, 1], [], []>} : vector<16x64xf32>, vector<64x32xf32>, vector<16x32xf32> -> vector<16x32xf32>
    %c344 = arith.constant 344 : index
    %c0_3 = arith.constant 0 : index
    %10 = vector.load %arg1[%c344, %c0_3] : memref<352x128xf32, #tpu.memory_space<vmem>>, vector<1x32xf32>
    %c345 = arith.constant 345 : index
    %c0_4 = arith.constant 0 : index
    %11 = vector.load %arg1[%c345, %c0_4] : memref<352x128xf32, #tpu.memory_space<vmem>>, vector<1x32xf32>
    %cst_5 = arith.constant 1.000000e+00 : f32
    %12 = vector.broadcast %cst_5 : f32 to vector<16x1xf32>
    %13 = arith.subf %12, %2 : vector<16x1xf32>
    %14 = vector.broadcast %10 : vector<1x32xf32> to vector<16x32xf32>
    %15 = vector.broadcast %13 : vector<16x1xf32> to vector<16x32xf32>
    %16 = arith.mulf %14, %15 : vector<16x32xf32>
    %17 = arith.addf %9, %16 : vector<16x32xf32>
    %18 = vector.broadcast %11 : vector<1x32xf32> to vector<16x32xf32>
    %19 = vector.broadcast %2 : vector<16x1xf32> to vector<16x32xf32>
    %20 = arith.mulf %18, %19 : vector<16x32xf32>
    %21 = arith.addf %17, %20 : vector<16x32xf32>
    %c320 = arith.constant 320 : index
    %c0_6 = arith.constant 0 : index
    %22 = vector.load %arg1[%c320, %c0_6] : memref<352x128xf32, #tpu.memory_space<vmem>>, vector<8x32xf32>
    %23 = tpu.concatenate %22, %22 in 0 : vector<8x32xf32>, vector<8x32xf32> -> vector<16x32xf32>
    %24 = arith.addf %21, %23 : vector<16x32xf32>
    %cst_7 = arith.constant dense<0.000000e+00> : vector<16xf32>
    %25 = vector.multi_reduction <add>, %24, %cst_7 [1] : vector<16x32xf32> to vector<16xf32>
    %26 = vector.shape_cast %25 : vector<16xf32> to vector<16x1xf32>
    %cst_8 = arith.constant 3.200000e+01 : f32
    %27 = vector.broadcast %cst_8 : f32 to vector<16x1xf32>
    %28 = arith.divf %26, %27 : vector<16x1xf32>
    %29 = vector.broadcast %28 : vector<16x1xf32> to vector<16x32xf32>
    %30 = arith.subf %24, %29 : vector<16x32xf32>
    %31 = arith.mulf %30, %30 : vector<16x32xf32>
    %cst_9 = arith.constant dense<0.000000e+00> : vector<16xf32>
    %32 = vector.multi_reduction <add>, %31, %cst_9 [1] : vector<16x32xf32> to vector<16xf32>
    %33 = vector.shape_cast %32 : vector<16xf32> to vector<16x1xf32>
    %cst_10 = arith.constant 3.200000e+01 : f32
    %34 = vector.broadcast %cst_10 : f32 to vector<16x1xf32>
    %35 = arith.divf %33, %34 : vector<16x1xf32>
    %cst_11 = arith.constant 9.99999996E-13 : f32
    %36 = vector.broadcast %cst_11 : f32 to vector<16x1xf32>
    %37 = arith.addf %35, %36 : vector<16x1xf32>
    %38 = math.rsqrt %37 : vector<16x1xf32>
    %39 = vector.broadcast %38 : vector<16x1xf32> to vector<16x32xf32>
    %40 = arith.mulf %30, %39 : vector<16x32xf32>
    %c346 = arith.constant 346 : index
    %c0_12 = arith.constant 0 : index
    %41 = vector.load %arg1[%c346, %c0_12] : memref<352x128xf32, #tpu.memory_space<vmem>>, vector<1x32xf32>
    %42 = vector.broadcast %41 : vector<1x32xf32> to vector<16x32xf32>
    %43 = arith.mulf %40, %42 : vector<16x32xf32>
    %c347 = arith.constant 347 : index
    %c0_13 = arith.constant 0 : index
    %44 = vector.load %arg1[%c347, %c0_13] : memref<352x128xf32, #tpu.memory_space<vmem>>, vector<1x32xf32>
    %45 = vector.broadcast %44 : vector<1x32xf32> to vector<16x32xf32>
    %46 = arith.addf %43, %45 : vector<16x32xf32>
    %cst_14 = arith.constant 0.000000e+00 : f32
    %47 = vector.broadcast %cst_14 : f32 to vector<3x32xf32>
    %48 = tpu.concatenate %46, %47 in 0 : vector<16x32xf32>, vector<3x32xf32> -> vector<19x32xf32>
    %c0_15 = arith.constant 0 : index
    %c0_16 = arith.constant 0 : index
    %49 = vector.load %arg1[%c0_15, %c0_16] : memref<352x128xf32, #tpu.memory_space<vmem>>, vector<32x128xf32>
    %cst_17 = arith.constant dense<0.000000e+00> : vector<16x128xf32>
    %50 = tpu.matmul %46, %49, %cst_17 {dimension_numbers = #tpu.dot_dimension_numbers<[1], [0], [0], [1], [0, 0, 1, 1], [], []>} : vector<16x32xf32>, vector<32x128xf32>, vector<16x128xf32> -> vector<16x128xf32>
    %51 = vector.extract_strided_slice %48 {offsets = [1, 0], sizes = [16, 32], strides = [1, 1]} : vector<19x32xf32> to vector<16x32xf32>
    %c32 = arith.constant 32 : index
    %c0_18 = arith.constant 0 : index
    %52 = vector.load %arg1[%c32, %c0_18] : memref<352x128xf32, #tpu.memory_space<vmem>>, vector<32x128xf32>
    %cst_19 = arith.constant dense<0.000000e+00> : vector<16x128xf32>
    %53 = tpu.matmul %51, %52, %cst_19 {dimension_numbers = #tpu.dot_dimension_numbers<[1], [0], [0], [1], [0, 0, 1, 1], [], []>} : vector<16x32xf32>, vector<32x128xf32>, vector<16x128xf32> -> vector<16x128xf32>
    %54 = arith.addf %50, %53 : vector<16x128xf32>
    %55 = vector.extract_strided_slice %48 {offsets = [2, 0], sizes = [16, 32], strides = [1, 1]} : vector<19x32xf32> to vector<16x32xf32>
    %c64 = arith.constant 64 : index
    %c0_20 = arith.constant 0 : index
    %56 = vector.load %arg1[%c64, %c0_20] : memref<352x128xf32, #tpu.memory_space<vmem>>, vector<32x128xf32>
    %cst_21 = arith.constant dense<0.000000e+00> : vector<16x128xf32>
    %57 = tpu.matmul %55, %56, %cst_21 {dimension_numbers = #tpu.dot_dimension_numbers<[1], [0], [0], [1], [0, 0, 1, 1], [], []>} : vector<16x32xf32>, vector<32x128xf32>, vector<16x128xf32> -> vector<16x128xf32>
    %58 = arith.addf %54, %57 : vector<16x128xf32>
    %59 = vector.extract_strided_slice %48 {offsets = [3, 0], sizes = [16, 32], strides = [1, 1]} : vector<19x32xf32> to vector<16x32xf32>
    %c96 = arith.constant 96 : index
    %c0_22 = arith.constant 0 : index
    %60 = vector.load %arg1[%c96, %c0_22] : memref<352x128xf32, #tpu.memory_space<vmem>>, vector<32x128xf32>
    %cst_23 = arith.constant dense<0.000000e+00> : vector<16x128xf32>
    %61 = tpu.matmul %59, %60, %cst_23 {dimension_numbers = #tpu.dot_dimension_numbers<[1], [0], [0], [1], [0, 0, 1, 1], [], []>} : vector<16x32xf32>, vector<32x128xf32>, vector<16x128xf32> -> vector<16x128xf32>
    %62 = arith.addf %58, %61 : vector<16x128xf32>
    %c348 = arith.constant 348 : index
    %c0_24 = arith.constant 0 : index
    %63 = vector.load %arg1[%c348, %c0_24] : memref<352x128xf32, #tpu.memory_space<vmem>>, vector<1x128xf32>
    %64 = vector.broadcast %63 : vector<1x128xf32> to vector<16x128xf32>
    %65 = arith.addf %62, %64 : vector<16x128xf32>
    %cst_25 = arith.constant 0.000000e+00 : f32
    %66 = vector.broadcast %cst_25 : f32 to vector<16x128xf32>
    %67 = arith.maximumf %65, %66 : vector<16x128xf32>
    %c328 = arith.constant 328 : index
    %c0_26 = arith.constant 0 : index
    %68 = vector.load %arg1[%c328, %c0_26] : memref<352x128xf32, #tpu.memory_space<vmem>>, vector<16x128xf32>
    %69 = arith.mulf %67, %68 : vector<16x128xf32>
    %70 = vector.shape_cast %69 : vector<16x128xf32> to vector<2x8x128xf32>
    %cst_27 = arith.constant dense<0xFF800000> : vector<2x128xf32>
    %71 = vector.multi_reduction <maximumf>, %70, %cst_27 [1] : vector<2x8x128xf32> to vector<2x128xf32>
    %c128 = arith.constant 128 : index
    %c0_28 = arith.constant 0 : index
    %72 = vector.load %arg1[%c128, %c0_28] : memref<352x128xf32, #tpu.memory_space<vmem>>, vector<128x128xf32>
    %cst_29 = arith.constant dense<0.000000e+00> : vector<2x128xf32>
    %73 = tpu.matmul %71, %72, %cst_29 {dimension_numbers = #tpu.dot_dimension_numbers<[1], [0], [0], [1], [0, 0, 1, 1], [], []>} : vector<2x128xf32>, vector<128x128xf32>, vector<2x128xf32> -> vector<2x128xf32>
    %c349 = arith.constant 349 : index
    %c0_30 = arith.constant 0 : index
    %74 = vector.load %arg1[%c349, %c0_30] : memref<352x128xf32, #tpu.memory_space<vmem>>, vector<1x128xf32>
    %75 = vector.broadcast %74 : vector<1x128xf32> to vector<2x128xf32>
    %76 = arith.addf %73, %75 : vector<2x128xf32>
    %77 = tpu.iota {dimensions = array<i32: 1>} : vector<2x128xi32>
    %c4_i32 = arith.constant 4 : i32
    %78 = vector.broadcast %c4_i32 : i32 to vector<2x128xi32>
    %79 = arith.cmpi slt, %77, %78 : vector<2x128xi32>
    %cst_31 = arith.constant -1.000000e+30 : f32
    %80 = vector.broadcast %cst_31 : f32 to vector<2x128xf32>
    %81 = arith.select %79, %76, %80 : vector<2x128xi1>, vector<2x128xf32>
    %cst_32 = arith.constant dense<0xFF800000> : vector<2xf32>
    %82 = vector.multi_reduction <maximumf>, %81, %cst_32 [1] : vector<2x128xf32> to vector<2xf32>
    %83 = vector.shape_cast %82 : vector<2xf32> to vector<2x1xf32>
    %84 = vector.broadcast %83 : vector<2x1xf32> to vector<2x128xf32>
    %85 = arith.subf %81, %84 : vector<2x128xf32>
    %86 = math.exp %85 : vector<2x128xf32>
    %cst_33 = arith.constant dense<0.000000e+00> : vector<2xf32>
    %87 = vector.multi_reduction <add>, %86, %cst_33 [1] : vector<2x128xf32> to vector<2xf32>
    %88 = vector.shape_cast %87 : vector<2xf32> to vector<2x1xf32>
    %89 = tpu.reciprocal %88 {approx = true} : vector<2x1xf32> -> vector<2x1xf32>
    %90 = vector.broadcast %89 : vector<2x1xf32> to vector<2x128xf32>
    %91 = arith.mulf %86, %90 : vector<2x128xf32>
    %cst_34 = arith.constant 0.000000e+00 : f32
    %92 = vector.broadcast %cst_34 : f32 to vector<4x128xf32>
    %93 = tpu.concatenate %76, %91, %92 in 0 : vector<2x128xf32>, vector<2x128xf32>, vector<4x128xf32> -> vector<8x128xf32>
    %c0_35 = arith.constant 0 : index
    %c0_36 = arith.constant 0 : index
    %94 = vector.load %arg2[%c0_35, %c0_36] : memref<8x128xf32, #tpu.memory_space<vmem>>, vector<8x128xf32>
    tpu.vector_store %arg2[%c0_35, %c0_36], %93 {strides = array<i32>} : memref<8x128xf32, #tpu.memory_space<vmem>>, vector<8x128xf32>,
    return
  }
}

</mosaic_0001>

<llo_original>
// kernel: bertcnn_forward.1
$region0: #{bertcnn_forward.1}
  #allocation0 [shape = 'u32[]', space=smem, size = 0x4, offset = 0x4, fixed_abs, tag = 'smem constant byte address 0x4 - core index']
  #allocation1 [shape = 'u32[144,128]{1,0:T(1,128)}', space=vmem, size = 0x12000, scoped, tag = 'internal scratch']
  %s0 = inlined_call_operand.vmem [shape: s32[16,128], index: 0, kind: input, shape index: {}]
  %s1 = inlined_call_operand.hbm [shape: f32[352,128], index: 1, kind: input, shape index: {}]
  %s2 = inlined_call_operand.vmem [shape: f32[8,128], index: 2, kind: output, shape index: {}]
  %s3 = sld [smem:[#allocation0]]
  $region22: #{bertcnn_forward.1} parent=0
    _
  %s5 = ssub.s32 1, %s3
  %s6 = scalar_select 0, %s5, %s3
  $region1: #{bertcnn_forward.1} parent=0
    #allocation2 [shape = 'u8[180224]{0}', space=vmem, size = 0x2c000, scoped, tag = 'input window, operand 1, single buffered']
    #allocation3 [shape = 's32[1]{0}', space=sflag, size = 0x4, scoped, tag = 'scoped memory for bertcnn_forward.1']
    %7 = vsyncpa [#allocation3], 0
    // Predicated region
    $region2: #{bertcnn_forward.1} parent=1 // pred_check
      _
    $region3: #{bertcnn_forward.1} parent=1 // pred_check_branch
      %9 = sbr.rel (0) target = $region5
    $region4: #{bertcnn_forward.1} parent=1 // pred_region
      _
    $region5: #{bertcnn_forward.1} parent=1 // pred_fallthru
      _
    // Predicated region
    $region6: #{bertcnn_forward.1} parent=1 // pred_check
      _
    $region7: #{bertcnn_forward.1} parent=1 // pred_check_branch
      %11 = sbr.rel (0) target = $region9
    $region8: #{bertcnn_forward.1} parent=1 // pred_region
      %s13 = ssub.s32 5632, 5632
      %14 = vsyncadd [#allocation3], %s13
      %s15 = sshll.u32 [#allocation2], 4
      %s16 = int_to_ptr.vmem [resolvable:$true] %s15
      %21 = dma.hbm_to_vmem [thread:$0]  %s1, 5632, %s16, [#allocation3], 128, 128, 8
    $region9: #{bertcnn_forward.1} parent=1 // pred_fallthru
      _
    // Predicated region
    $region10: #{bertcnn_forward.1} parent=1 // pred_check
      _
    $region11: #{bertcnn_forward.1} parent=1 // pred_check_branch
      %23 = sbr.rel (0) target = $region13
    $region12: #{bertcnn_forward.1} parent=1 // pred_region
      %24 = dma.done [#allocation3], 5632
    $region13: #{bertcnn_forward.1} parent=1 // pred_fallthru
      _
    %v25 = vld [vmem:[%s0] sm:$0xff]
    %v26 = vld [vmem:[%s0 + $0x8] sm:$0xff]
    %v27 = vcvt.s32.f32 %v25
    %v28 = vcvt.s32.f32 %v26
    %v29 = vlaneseq
    %v30 = vand.u32 %v29, 127
    %31 = vset.pattern.permute.xlu0 0
    %32 = vperm.xlu0 %31, %v25
    %v33 = vpop.permute.xlu0 %32
    %34 = vset.pattern.permute.xlu0 0
    %35 = vperm.xlu0 %34, %v26
    %v36 = vpop.permute.xlu0 %35
    %vm37 = vcmp.eq.s32.totalorder %v30, %v33
    %vm38 = vcmp.eq.s32.totalorder %v30, %v36
    %v39 = vsel %vm37, 1, 0
    %v40 = vsel %vm38, 1, 0
    %v41 = vcvt.s32.f32 %v39
    %v42 = vcvt.s32.f32 %v40
    %v43 = vld [vmem:[#allocation2 + $0x100] sm:$0xff]
    %v44 = vld [vmem:[#allocation2 + $0x108] sm:$0xff]
    %v45 = vld [vmem:[#allocation2 + $0x110] sm:$0xff]
    %v46 = vld [vmem:[#allocation2 + $0x118] sm:$0xff]
    %v47 = vld [vmem:[#allocation2 + $0x120] sm:$0xff]
    %v48 = vld [vmem:[#allocation2 + $0x128] sm:$0xff]
    %v49 = vld [vmem:[#allocation2 + $0x130] sm:$0xff]
    %v50 = vld [vmem:[#allocation2 + $0x138] sm:$0xff]
    %v51 = vld [vmem:[#allocation2 + $0x158] sm:$0x1]
    %v52 = vld [vmem:[#allocation2 + $0x159] sm:$0x1]
    %v53 = vsub.f32 1.0, %v27
    %v54 = vsub.f32 1.0, %v28
    %v55 = vlaneseq
    %v56 = vshrl.u32 %v55, 7
    %v57 = vsub.s32 0, %v56
    %v58 = vrot.slane %v51, %v57
    %60 = vset.pattern.permute.xlu0 1
    %61 = vperm.xlu0 %60, %v53
    %v62 = vpop.permute.xlu0 %61
    %65 = vset.pattern.permute.xlu0 1
    %66 = vperm.xlu0 %65, %v54
    %v67 = vpop.permute.xlu0 %66
    %v69 = vmul.f32 %v58, %v62
    %v70 = vmul.f32 %v58, %v67
    %vm71 = vcmask 523264
    %v73 = vsel %vm71, %v41, 0
    %v76 = vsel %vm71, %v42, 0
    %78 = vmatprep.subr.mxu0 0.0
    %79 = vmatpush1.msra.mxu0 %v43
    %80 = vmatprep.subr.mxu0 0.0
    %81 = vmatpush1.msra.mxu0 %v44
    %82 = vmatprep.subr.mxu0 0.0
    %83 = vmatpush1.msra.mxu0 %v45
    %84 = vmatprep.subr.mxu0 0.0
    %85 = vmatpush1.msra.mxu0 %v46
    %86 = vmatprep.subr.mxu0 0.0
    %87 = vmatpush1.msra.mxu0 %v47
    %88 = vmatprep.subr.mxu0 0.0
    %89 = vmatpush1.msra.mxu0 %v48
    %90 = vmatprep.subr.mxu0 0.0
    %91 = vmatpush1.msra.mxu0 %v49
    %92 = vmatprep.subr.mxu0 0.0
    %93 = vmatpush1.msra.mxu0 %v50
    %94 = vmatprep.subr.mxu0 0.0
    %95 = vmatpush1.msra.mxu0 0.0
    %96 = vmatprep.subr.mxu0 0.0
    %97 = vmatpush1.msra.mxu0 0.0
    %98 = vmatprep.subr.mxu0 0.0
    %99 = vmatpush1.msra.mxu0 0.0
    %100 = vmatprep.subr.mxu0 0.0
    %101 = vmatpush1.msra.mxu0 0.0
    %102 = vmatprep.subr.mxu0 0.0
    %103 = vmatpush1.msra.mxu0 0.0
    %104 = vmatprep.subr.mxu0 0.0
    %105 = vmatpush1.msra.mxu0 0.0
    %106 = vmatprep.subr.mxu0 0.0
    %107 = vmatpush1.msra.mxu0 0.0
    %108 = vmatprep.subr.mxu0 0.0
    %109 = vmatpush1.msra.mxu0 0.0
    %110 = vmatprep.subr.mxu0 0.0
    %111 = vmatpush1.msra.mxu0 0.0
    %112 = vmatprep.subr.mxu0 0.0
    %113 = vmatpush1.msra.mxu0 0.0
    %114 = vmatprep.subr.mxu0 0.0
    %115 = vmatpush1.msra.mxu0 0.0
    %116 = vmatprep.subr.mxu0 0.0
    %117 = vmatpush1.msra.mxu0 0.0
    %118 = vmatprep.subr.mxu0 0.0
    %119 = vmatpush1.msra.mxu0 0.0
    %120 = vmatprep.subr.mxu0 0.0
    %121 = vmatpush1.msra.mxu0 0.0
    %122 = vmatprep.subr.mxu0 0.0
    %123 = vmatpush1.msra.mxu0 0.0
    %124 = vmatprep.subr.mxu0 0.0
    %125 = vmatpush1.msra.mxu0 0.0
    %126 = vmatprep.subr.mxu0 0.0
    %127 = vmatpush1.msra.mxu0 0.0
    %128 = vmatprep.subr.mxu0 0.0
    %129 = vmatpush1.msra.mxu0 0.0
    %130 = vmatprep.subr.mxu0 0.0
    %131 = vmatpush1.msra.mxu0 0.0
    %132 = vmatprep.subr.mxu0 0.0
    %133 = vmatpush1.msra.mxu0 0.0
    %134 = vmatprep.subr.mxu0 0.0
    %135 = vmatpush1.msra.mxu0 0.0
    %136 = vmatprep.subr.mxu0 0.0
    %137 = vmatpush1.msra.mxu0 0.0
    %138 = vmatprep.subr.mxu0 0.0
    %139 = vmatpush1.msra.mxu0 0.0
    %140 = vmatprep.subr.mxu0 0.0
    %141 = vmatpush1.msra.mxu0 0.0
    %142 = vmatprep.mubr.f32.mxu0 0.0
    %143 = vmatmul.mubr.f32.gmra.mrb[0].mxu0 %v73
    %v144 = vpop.f32.mrb[0].mxu0
    %v145 = vadd.f32 %v69, %v144
    %v146 = vpop.f32.mrb[0].mxu0
    %147 = vmatprep.mubr.f32.mxu0 0.0
    %148 = vmatmul.mubr.f32.gmra.mrb[0].mxu0 %v76
    %v149 = vpop.f32.mrb[0].mxu0
    %v150 = vadd.f32 %v70, %v149
    %v151 = vpop.f32.mrb[0].mxu0
    %152 = vdwg.mxu0
    %v153 = vlaneseq
    %v154 = vshrl.u32 %v153, 7
    %v155 = vsub.s32 0, %v154
    %v156 = vrot.slane %v52, %v155
    %158 = vset.pattern.permute.xlu0 1
    %159 = vperm.xlu0 %158, %v27
    %v160 = vpop.permute.xlu0 %159
    %163 = vset.pattern.permute.xlu0 1
    %164 = vperm.xlu0 %163, %v28
    %v165 = vpop.permute.xlu0 %164
    %v167 = vmul.f32 %v156, %v160
    %v168 = vmul.f32 %v156, %v165
    %v169 = vadd.f32 %v145, %v167
    %v170 = vadd.f32 %v150, %v168
    %v171 = vld [vmem:[#allocation2 + $0x140] sm:$0xff]
    %v172 = vadd.f32 %v169, %v171
    %v173 = vadd.f32 %v170, %v171
    %vm174 = vcmask 261120
    %v175 = vsel %vm174, %v172, 0.0
    %176 = vadd.xlane.f32.xlu0 %v175
    %v177 = vpop.xlane.xlu0 %176
    %v178 = vsel %vm174, %v173, 0.0
    %179 = vadd.xlane.f32.xlu0 %v178
    %v180 = vpop.xlane.xlu0 %179
    %v181 = vrcp.pop 32.0
    %v182 = vmul.f32 %v177, %v181
    %v183 = vmul.f32 %v180, %v181
    %v184 = vsub.f32 %v172, %v182
    %v185 = vsub.f32 %v173, %v183
    %v186 = vmul.f32 %v184, %v184
    %v187 = vmul.f32 %v185, %v185
    %v188 = vsel %vm174, %v186, 0.0
    %189 = vadd.xlane.f32.xlu0 %v188
    %v190 = vpop.xlane.xlu0 %189
    %v191 = vsel %vm174, %v187, 0.0
    %192 = vadd.xlane.f32.xlu0 %v191
    %v193 = vpop.xlane.xlu0 %192
    %v194 = vmul.f32 %v190, %v181
    %v195 = vmul.f32 %v193, %v181
    %v196 = vadd.f32 %v194, 1e-12
    %v197 = vadd.f32 %v195, 1e-12
    %v198 = vrsqrt.pop %v196
    %v199 = vrsqrt.pop %v197
    %v200 = vmul.f32 %v184, %v198
    %v201 = vmul.f32 %v185, %v199
    %v202 = vld [vmem:[#allocation2 + $0x15a] sm:$0x1]
    %v203 = vlaneseq
    %v204 = vshrl.u32 %v203, 7
    %v205 = vsub.s32 0, %v204
    %v206 = vrot.slane %v202, %v205
    %v207 = vmul.f32 %v200, %v206
    %v208 = vmul.f32 %v201, %v206
    %v209 = vld [vmem:[#allocation2 + $0x15b] sm:$0x1]
    %v210 = vlaneseq
    %v211 = vshrl.u32 %v210, 7
    %v212 = vsub.s32 0, %v211
    %v213 = vrot.slane %v209, %v212
    %v214 = vadd.f32 %v207, %v213
    %v215 = vadd.f32 %v208, %v213
    %v216 = vld [vmem:[#allocation2] sm:$0xff]
    %v217 = vld [vmem:[#allocation2 + $0x8] sm:$0xff]
    %v218 = vld [vmem:[#allocation2 + $0x10] sm:$0xff]
    %v219 = vld [vmem:[#allocation2 + $0x18] sm:$0xff]
    %v220 = vld [vmem:[#allocation2 + $0x20] sm:$0xff]
    %v221 = vld [vmem:[#allocation2 + $0x28] sm:$0xff]
    %v222 = vld [vmem:[#allocation2 + $0x30] sm:$0xff]
    %v223 = vld [vmem:[#allocation2 + $0x38] sm:$0xff]
    %vm227 = vcmask 1046528
    %v228 = vrot.slane %v214, 1
    %v229 = vrot.slane %v215, 1
    %v230 = vsel %vm227, %v228, %v229
    %v231 = vrot.slane 0.0, 1
    %v232 = vsel %vm227, %v229, %v231
    %v233 = vsel %vm174, %v230, 0
    %v235 = vsel %vm174, %v232, 0
    %237 = vmatprep.subr.mxu0 0.0
    %238 = vmatpush1.msra.mxu0 %v220
    %239 = vmatprep.subr.mxu0 0.0
    %240 = vmatpush1.msra.mxu0 %v221
    %241 = vmatprep.subr.mxu0 0.0
    %242 = vmatpush1.msra.mxu0 %v222
    %243 = vmatprep.subr.mxu0 0.0
    %244 = vmatpush1.msra.mxu0 %v223
    %245 = vmatprep.subr.mxu0 0.0
    %246 = vmatpush1.msra.mxu0 0.0
    %247 = vmatprep.subr.mxu0 0.0
    %248 = vmatpush1.msra.mxu0 0.0
    %249 = vmatprep.subr.mxu0 0.0
    %250 = vmatpush1.msra.mxu0 0.0
    %251 = vmatprep.subr.mxu0 0.0
    %252 = vmatpush1.msra.mxu0 0.0
    %253 = vmatprep.subr.mxu0 0.0
    %254 = vmatpush1.msra.mxu0 0.0
    %255 = vmatprep.subr.mxu0 0.0
    %256 = vmatpush1.msra.mxu0 0.0
    %257 = vmatprep.subr.mxu0 0.0
    %258 = vmatpush1.msra.mxu0 0.0
    %259 = vmatprep.subr.mxu0 0.0
    %260 = vmatpush1.msra.mxu0 0.0
    %261 = vmatprep.subr.mxu0 0.0
    %262 = vmatpush1.msra.mxu0 0.0
    %263 = vmatprep.subr.mxu0 0.0
    %264 = vmatpush1.msra.mxu0 0.0
    %265 = vmatprep.subr.mxu0 0.0
    %266 = vmatpush1.msra.mxu0 0.0
    %267 = vmatprep.subr.mxu0 0.0
    %268 = vmatpush1.msra.mxu0 0.0
    %269 = vmatprep.subr.mxu0 0.0
    %270 = vmatpush1.msra.mxu0 0.0
    %271 = vmatprep.subr.mxu0 0.0
    %272 = vmatpush1.msra.mxu0 0.0
    %273 = vmatprep.subr.mxu0 0.0
    %274 = vmatpush1.msra.mxu0 0.0
    %275 = vmatprep.subr.mxu0 0.0
    %276 = vmatpush1.msra.mxu0 0.0
    %277 = vmatprep.subr.mxu0 0.0
    %278 = vmatpush1.msra.mxu0 0.0
    %279 = vmatprep.subr.mxu0 0.0
    %280 = vmatpush1.msra.mxu0 0.0
    %281 = vmatprep.subr.mxu0 0.0
    %282 = vmatpush1.msra.mxu0 0.0
    %283 = vmatprep.subr.mxu0 0.0
    %284 = vmatpush1.msra.mxu0 0.0
    %285 = vmatprep.subr.mxu0 0.0
    %286 = vmatpush1.msra.mxu0 0.0
    %287 = vmatprep.subr.mxu0 0.0
    %288 = vmatpush1.msra.mxu0 0.0
    %289 = vmatprep.subr.mxu0 0.0
    %290 = vmatpush1.msra.mxu0 0.0
    %291 = vmatprep.subr.mxu0 0.0
    %292 = vmatpush1.msra.mxu0 0.0
    %293 = vmatprep.subr.mxu0 0.0
    %294 = vmatpush1.msra.mxu0 0.0
    %295 = vmatprep.subr.mxu0 0.0
    %296 = vmatpush1.msra.mxu0 0.0
    %297 = vmatprep.subr.mxu0 0.0
    %298 = vmatpush1.msra.mxu0 0.0
    %299 = vmatprep.subr.mxu0 0.0
    %300 = vmatpush1.msra.mxu0 0.0
    %301 = vmatprep.mubr.f32.mxu0 0.0
    %302 = vmatmul.mubr.f32.gmra.mrb[0].mxu0 %v233
    %v303 = vpop.f32.mrb[0].mxu0
    %v304 = vadd.f32 0.0, %v303
    %v305 = vpop.f32.mrb[0].mxu0
    %306 = vmatprep.mubr.f32.mxu0 0.0
    %307 = vmatmul.mubr.f32.gmra.mrb[0].mxu0 %v235
    %v308 = vpop.f32.mrb[0].mxu0
    %v309 = vadd.f32 0.0, %v308
    %v310 = vpop.f32.mrb[0].mxu0
    %311 = vdwg.mxu0
    %v312 = vsel %vm174, %v214, 0
    %v314 = vsel %vm174, %v215, 0
    %316 = vmatprep.subr.mxu0 0.0
    %317 = vmatpush1.msra.mxu0 %v216
    %318 = vmatprep.subr.mxu0 0.0
    %319 = vmatpush1.msra.mxu0 %v217
    %320 = vmatprep.subr.mxu0 0.0
    %321 = vmatpush1.msra.mxu0 %v218
    %322 = vmatprep.subr.mxu0 0.0
    %323 = vmatpush1.msra.mxu0 %v219
    %324 = vmatprep.subr.mxu0 0.0
    %325 = vmatpush1.msra.mxu0 0.0
    %326 = vmatprep.subr.mxu0 0.0
    %327 = vmatpush1.msra.mxu0 0.0
    %328 = vmatprep.subr.mxu0 0.0
    %329 = vmatpush1.msra.mxu0 0.0
    %330 = vmatprep.subr.mxu0 0.0
    %331 = vmatpush1.msra.mxu0 0.0
    %332 = vmatprep.subr.mxu0 0.0
    %333 = vmatpush1.msra.mxu0 0.0
    %334 = vmatprep.subr.mxu0 0.0
    %335 = vmatpush1.msra.mxu0 0.0
    %336 = vmatprep.subr.mxu0 0.0
    %337 = vmatpush1.msra.mxu0 0.0
    %338 = vmatprep.subr.mxu0 0.0
    %339 = vmatpush1.msra.mxu0 0.0
    %340 = vmatprep.subr.mxu0 0.0
    %341 = vmatpush1.msra.mxu0 0.0
    %342 = vmatprep.subr.mxu0 0.0
    %343 = vmatpush1.msra.mxu0 0.0
    %344 = vmatprep.subr.mxu0 0.0
    %345 = vmatpush1.msra.mxu0 0.0
    %346 = vmatprep.subr.mxu0 0.0
    %347 = vmatpush1.msra.mxu0 0.0
    %348 = vmatprep.subr.mxu0 0.0
    %349 = vmatpush1.msra.mxu0 0.0
    %350 = vmatprep.subr.mxu0 0.0
    %351 = vmatpush1.msra.mxu0 0.0
    %352 = vmatprep.subr.mxu0 0.0
    %353 = vmatpush1.msra.mxu0 0.0
    %354 = vmatprep.subr.mxu0 0.0
    %355 = vmatpush1.msra.mxu0 0.0
    %356 = vmatprep.subr.mxu0 0.0
    %357 = vmatpush1.msra.mxu0 0.0
    %358 = vmatprep.subr.mxu0 0.0
    %359 = vmatpush1.msra.mxu0 0.0
    %360 = vmatprep.subr.mxu0 0.0
    %361 = vmatpush1.msra.mxu0 0.0
    %362 = vmatprep.subr.mxu0 0.0
    %363 = vmatpush1.msra.mxu0 0.0
    %364 = vmatprep.subr.mxu0 0.0
    %365 = vmatpush1.msra.mxu0 0.0
    %366 = vmatprep.subr.mxu0 0.0
    %367 = vmatpush1.msra.mxu0 0.0
    %368 = vmatprep.subr.mxu0 0.0
    %369 = vmatpush1.msra.mxu0 0.0
    %370 = vmatprep.subr.mxu0 0.0
    %371 = vmatpush1.msra.mxu0 0.0
    %372 = vmatprep.subr.mxu0 0.0
    %373 = vmatpush1.msra.mxu0 0.0
    %374 = vmatprep.subr.mxu0 0.0
    %375 = vmatpush1.msra.mxu0 0.0
    %376 = vmatprep.subr.mxu0 0.0
    %377 = vmatpush1.msra.mxu0 0.0
    %378 = vmatprep.subr.mxu0 0.0
    %379 = vmatpush1.msra.mxu0 0.0
    %380 = vmatprep.mubr.f32.mxu0 0.0
    %381 = vmatmul.mubr.f32.gmra.mrb[0].mxu0 %v312
    %v382 = vpop.f32.mrb[0].mxu0
    %v383 = vadd.f32 %v304, %v382
    %v384 = vpop.f32.mrb[0].mxu0
    %385 = vmatprep.mubr.f32.mxu0 0.0
    %386 = vmatmul.mubr.f32.gmra.mrb[0].mxu0 %v314
    %v387 = vpop.f32.mrb[0].mxu0
    %v388 = vadd.f32 %v309, %v387
    %v389 = vpop.f32.mrb[0].mxu0
    %390 = vdwg.mxu0
    %v391 = vld [vmem:[#allocation2 + $0x40] sm:$0xff]
    %v392 = vld [vmem:[#allocation2 + $0x48] sm:$0xff]
    %v393 = vld [vmem:[#allocation2 + $0x50] sm:$0xff]
    %v394 = vld [vmem:[#allocation2 + $0x58] sm:$0xff]
    %vm395 = vcmask 1045504
    %v396 = vrot.slane %v214, 2
    %v397 = vrot.slane %v215, 2
    %v398 = vsel %vm395, %v396, %v397
    %v399 = vrot.slane 0.0, 2
    %v400 = vsel %vm395, %v397, %v399
    %v401 = vsel %vm174, %v398, 0
    %v403 = vsel %vm174, %v400, 0
    %405 = vmatprep.subr.mxu0 0.0
    %406 = vmatpush1.msra.mxu0 %v391
    %407 = vmatprep.subr.mxu0 0.0
    %408 = vmatpush1.msra.mxu0 %v392
    %409 = vmatprep.subr.mxu0 0.0
    %410 = vmatpush1.msra.mxu0 %v393
    %411 = vmatprep.subr.mxu0 0.0
    %412 = vmatpush1.msra.mxu0 %v394
    %413 = vmatprep.subr.mxu0 0.0
    %414 = vmatpush1.msra.mxu0 0.0
    %415 = vmatprep.subr.mxu0 0.0
    %416 = vmatpush1.msra.mxu0 0.0
    %417 = vmatprep.subr.mxu0 0.0
    %418 = vmatpush1.msra.mxu0 0.0
    %419 = vmatprep.subr.mxu0 0.0
    %420 = vmatpush1.msra.mxu0 0.0
    %421 = vmatprep.subr.mxu0 0.0
    %422 = vmatpush1.msra.mxu0 0.0
    %423 = vmatprep.subr.mxu0 0.0
    %424 = vmatpush1.msra.mxu0 0.0
    %425 = vmatprep.subr.mxu0 0.0
    %426 = vmatpush1.msra.mxu0 0.0
    %427 = vmatprep.subr.mxu0 0.0
    %428 = vmatpush1.msra.mxu0 0.0
    %429 = vmatprep.subr.mxu0 0.0
    %430 = vmatpush1.msra.mxu0 0.0
    %431 = vmatprep.subr.mxu0 0.0
    %432 = vmatpush1.msra.mxu0 0.0
    %433 = vmatprep.subr.mxu0 0.0
    %434 = vmatpush1.msra.mxu0 0.0
    %435 = vmatprep.subr.mxu0 0.0
    %436 = vmatpush1.msra.mxu0 0.0
    %437 = vmatprep.subr.mxu0 0.0
    %438 = vmatpush1.msra.mxu0 0.0
    %439 = vmatprep.subr.mxu0 0.0
    %440 = vmatpush1.msra.mxu0 0.0
    %441 = vmatprep.subr.mxu0 0.0
    %442 = vmatpush1.msra.mxu0 0.0
    %443 = vmatprep.subr.mxu0 0.0
    %444 = vmatpush1.msra.mxu0 0.0
    %445 = vmatprep.subr.mxu0 0.0
    %446 = vmatpush1.msra.mxu0 0.0
    %447 = vmatprep.subr.mxu0 0.0
    %448 = vmatpush1.msra.mxu0 0.0
    %449 = vmatprep.subr.mxu0 0.0
    %450 = vmatpush1.msra.mxu0 0.0
    %451 = vmatprep.subr.mxu0 0.0
    %452 = vmatpush1.msra.mxu0 0.0
    %453 = vmatprep.subr.mxu0 0.0
    %454 = vmatpush1.msra.mxu0 0.0
    %455 = vmatprep.subr.mxu0 0.0
    %456 = vmatpush1.msra.mxu0 0.0
    %457 = vmatprep.subr.mxu0 0.0
    %458 = vmatpush1.msra.mxu0 0.0
    %459 = vmatprep.subr.mxu0 0.0
    %460 = vmatpush1.msra.mxu0 0.0
    %461 = vmatprep.subr.mxu0 0.0
    %462 = vmatpush1.msra.mxu0 0.0
    %463 = vmatprep.subr.mxu0 0.0
    %464 = vmatpush1.msra.mxu0 0.0
    %465 = vmatprep.subr.mxu0 0.0
    %466 = vmatpush1.msra.mxu0 0.0
    %467 = vmatprep.subr.mxu0 0.0
    %468 = vmatpush1.msra.mxu0 0.0
    %469 = vmatprep.mubr.f32.mxu0 0.0
    %470 = vmatmul.mubr.f32.gmra.mrb[0].mxu0 %v401
    %v471 = vpop.f32.mrb[0].mxu0
    %v472 = vadd.f32 0.0, %v471
    %v473 = vpop.f32.mrb[0].mxu0
    %474 = vmatprep.mubr.f32.mxu0 0.0
    %475 = vmatmul.mubr.f32.gmra.mrb[0].mxu0 %v403
    %v476 = vpop.f32.mrb[0].mxu0
    %v477 = vadd.f32 0.0, %v476
    %v478 = vpop.f32.mrb[0].mxu0
    %479 = vdwg.mxu0
    %v480 = vadd.f32 %v383, %v472
    %v481 = vadd.f32 %v388, %v477
    %v482 = vld [vmem:[#allocation2 + $0x60] sm:$0xff]
    %v483 = vld [vmem:[#allocation2 + $0x68] sm:$0xff]
    %v484 = vld [vmem:[#allocation2 + $0x70] sm:$0xff]
    %v485 = vld [vmem:[#allocation2 + $0x78] sm:$0xff]
    %vm486 = vcmask 1044480
    %v487 = vrot.slane %v214, 3
    %v488 = vrot.slane %v215, 3
    %v489 = vsel %vm486, %v487, %v488
    %v490 = vrot.slane 0.0, 3
    %v491 = vsel %vm486, %v488, %v490
    %v492 = vsel %vm174, %v489, 0
    %v494 = vsel %vm174, %v491, 0
    %496 = vmatprep.subr.mxu0 0.0
    %497 = vmatpush1.msra.mxu0 %v482
    %498 = vmatprep.subr.mxu0 0.0
    %499 = vmatpush1.msra.mxu0 %v483
    %500 = vmatprep.subr.mxu0 0.0
    %501 = vmatpush1.msra.mxu0 %v484
    %502 = vmatprep.subr.mxu0 0.0
    %503 = vmatpush1.msra.mxu0 %v485
    %504 = vmatprep.subr.mxu0 0.0
    %505 = vmatpush1.msra.mxu0 0.0
    %506 = vmatprep.subr.mxu0 0.0
    %507 = vmatpush1.msra.mxu0 0.0
    %508 = vmatprep.subr.mxu0 0.0
    %509 = vmatpush1.msra.mxu0 0.0
    %510 = vmatprep.subr.mxu0 0.0
    %511 = vmatpush1.msra.mxu0 0.0
    %512 = vmatprep.subr.mxu0 0.0
    %513 = vmatpush1.msra.mxu0 0.0
    %514 = vmatprep.subr.mxu0 0.0
    %515 = vmatpush1.msra.mxu0 0.0
    %516 = vmatprep.subr.mxu0 0.0
    %517 = vmatpush1.msra.mxu0 0.0
    %518 = vmatprep.subr.mxu0 0.0
    %519 = vmatpush1.msra.mxu0 0.0
    %520 = vmatprep.subr.mxu0 0.0
    %521 = vmatpush1.msra.mxu0 0.0
    %522 = vmatprep.subr.mxu0 0.0
    %523 = vmatpush1.msra.mxu0 0.0
    %524 = vmatprep.subr.mxu0 0.0
    %525 = vmatpush1.msra.mxu0 0.0
    %526 = vmatprep.subr.mxu0 0.0
    %527 = vmatpush1.msra.mxu0 0.0
    %528 = vmatprep.subr.mxu0 0.0
    %529 = vmatpush1.msra.mxu0 0.0
    %530 = vmatprep.subr.mxu0 0.0
    %531 = vmatpush1.msra.mxu0 0.0
    %532 = vmatprep.subr.mxu0 0.0
    %533 = vmatpush1.msra.mxu0 0.0
    %534 = vmatprep.subr.mxu0 0.0
    %535 = vmatpush1.msra.mxu0 0.0
    %536 = vmatprep.subr.mxu0 0.0
    %537 = vmatpush1.msra.mxu0 0.0
    %538 = vmatprep.subr.mxu0 0.0
    %539 = vmatpush1.msra.mxu0 0.0
    %540 = vmatprep.subr.mxu0 0.0
    %541 = vmatpush1.msra.mxu0 0.0
    %542 = vmatprep.subr.mxu0 0.0
    %543 = vmatpush1.msra.mxu0 0.0
    %544 = vmatprep.subr.mxu0 0.0
    %545 = vmatpush1.msra.mxu0 0.0
    %546 = vmatprep.subr.mxu0 0.0
    %547 = vmatpush1.msra.mxu0 0.0
    %548 = vmatprep.subr.mxu0 0.0
    %549 = vmatpush1.msra.mxu0 0.0
    %550 = vmatprep.subr.mxu0 0.0
    %551 = vmatpush1.msra.mxu0 0.0
    %552 = vmatprep.subr.mxu0 0.0
    %553 = vmatpush1.msra.mxu0 0.0
    %554 = vmatprep.subr.mxu0 0.0
    %555 = vmatpush1.msra.mxu0 0.0
    %556 = vmatprep.subr.mxu0 0.0
    %557 = vmatpush1.msra.mxu0 0.0
    %558 = vmatprep.subr.mxu0 0.0
    %559 = vmatpush1.msra.mxu0 0.0
    %560 = vmatprep.mubr.f32.mxu0 0.0
    %561 = vmatmul.mubr.f32.gmra.mrb[0].mxu0 %v492
    %v562 = vpop.f32.mrb[0].mxu0
    %v563 = vadd.f32 0.0, %v562
    %v564 = vpop.f32.mrb[0].mxu0
    %565 = vmatprep.mubr.f32.mxu0 0.0
    %566 = vmatmul.mubr.f32.gmra.mrb[0].mxu0 %v494
    %v567 = vpop.f32.mrb[0].mxu0
    %v568 = vadd.f32 0.0, %v567
    %v569 = vpop.f32.mrb[0].mxu0
    %570 = vdwg.mxu0
    %v571 = vadd.f32 %v480, %v563
    %v572 = vadd.f32 %v481, %v568
    %v573 = vld [vmem:[#allocation2 + $0x15c] sm:$0x1]
    %v574 = vlaneseq
    %v575 = vshrl.u32 %v574, 7
    %v576 = vsub.s32 0, %v575
    %v577 = vrot.slane %v573, %v576
    %v578 = vadd.f32 %v571, %v577
    %v579 = vadd.f32 %v572, %v577
    %v580 = vmax.f32 %v578, 0.0
    %v581 = vmax.f32 %v579, 0.0
    %v582 = vld [vmem:[#allocation2 + $0x148] sm:$0xff]
    %v583 = vld [vmem:[#allocation2 + $0x150] sm:$0xff]
    %v584 = vmul.f32 %v580, %v582
    %v585 = vmul.f32 %v581, %v583
    %v586 = vrot.slane %v584, 4
    %v587 = vmax.f32 %v584, %v586
    %v588 = vrot.slane %v587, 2
    %v589 = vmax.f32 %v587, %v588
    %v590 = vrot.slane %v589, 1
    %v591 = vmax.f32 %v589, %v590
    %v592 = vrot.slane %v585, 4
    %v593 = vmax.f32 %v585, %v592
    %v594 = vrot.slane %v593, 2
    %v595 = vmax.f32 %v593, %v594
    %v596 = vrot.slane %v595, 1
    %v597 = vmax.f32 %v595, %v596
    %v598 = vld [vmem:[#allocation2 + $0x80] sm:$0xff]
    %v599 = vld [vmem:[#allocation2 + $0x88] sm:$0xff]
    %v600 = vld [vmem:[#allocation2 + $0x90] sm:$0xff]
    %v601 = vld [vmem:[#allocation2 + $0x98] sm:$0xff]
    %v602 = vld [vmem:[#allocation2 + $0xa0] sm:$0xff]
    %v603 = vld [vmem:[#allocation2 + $0xa8] sm:$0xff]
    %v604 = vld [vmem:[#allocation2 + $0xb0] sm:$0xff]
    %v605 = vld [vmem:[#allocation2 + $0xb8] sm:$0xff]
    %v606 = vld [vmem:[#allocation2 + $0xc0] sm:$0xff]
    %v607 = vld [vmem:[#allocation2 + $0xc8] sm:$0xff]
    %v608 = vld [vmem:[#allocation2 + $0xd0] sm:$0xff]
    %v609 = vld [vmem:[#allocation2 + $0xd8] sm:$0xff]
    %v610 = vld [vmem:[#allocation2 + $0xe0] sm:$0xff]
    %v611 = vld [vmem:[#allocation2 + $0xe8] sm:$0xff]
    %v612 = vld [vmem:[#allocation2 + $0xf0] sm:$0xff]
    %v613 = vld [vmem:[#allocation2 + $0xf8] sm:$0xff]
    %v614 = vld [vmem:[#allocation2 + $0x15d] sm:$0x1]
    %v615 = vlaneseq
    %v616 = vshrl.u32 %v615, 7
    %v617 = vsub.s32 0, %v616
    %v618 = vrot.slane %v614, %v617
    %vm621 = vcmask 1041409
    %v622 = vsel %vm621, %v597, %v591
    %624 = vmatprep.subr.mxu0 0.0
    %625 = vmatpush1.msra.mxu0 %v598
    %626 = vmatprep.subr.mxu0 0.0
    %627 = vmatpush1.msra.mxu0 %v599
    %628 = vmatprep.subr.mxu0 0.0
    %629 = vmatpush1.msra.mxu0 %v600
    %630 = vmatprep.subr.mxu0 0.0
    %631 = vmatpush1.msra.mxu0 %v601
    %632 = vmatprep.subr.mxu0 0.0
    %633 = vmatpush1.msra.mxu0 %v602
    %634 = vmatprep.subr.mxu0 0.0
    %635 = vmatpush1.msra.mxu0 %v603
    %636 = vmatprep.subr.mxu0 0.0
    %637 = vmatpush1.msra.mxu0 %v604
    %638 = vmatprep.subr.mxu0 0.0
    %639 = vmatpush1.msra.mxu0 %v605
    %640 = vmatprep.subr.mxu0 0.0
    %641 = vmatpush1.msra.mxu0 %v606
    %642 = vmatprep.subr.mxu0 0.0
    %643 = vmatpush1.msra.mxu0 %v607
    %644 = vmatprep.subr.mxu0 0.0
    %645 = vmatpush1.msra.mxu0 %v608
    %646 = vmatprep.subr.mxu0 0.0
    %647 = vmatpush1.msra.mxu0 %v609
    %648 = vmatprep.subr.mxu0 0.0
    %649 = vmatpush1.msra.mxu0 %v610
    %650 = vmatprep.subr.mxu0 0.0
    %651 = vmatpush1.msra.mxu0 %v611
    %652 = vmatprep.subr.mxu0 0.0
    %653 = vmatpush1.msra.mxu0 %v612
    %654 = vmatprep.subr.mxu0 0.0
    %655 = vmatpush1.msra.mxu0 %v613
    %656 = vmatprep.subr.mxu0 0.0
    %657 = vmatpush1.msra.mxu0 0.0
    %658 = vmatprep.subr.mxu0 0.0
    %659 = vmatpush1.msra.mxu0 0.0
    %660 = vmatprep.subr.mxu0 0.0
    %661 = vmatpush1.msra.mxu0 0.0
    %662 = vmatprep.subr.mxu0 0.0
    %663 = vmatpush1.msra.mxu0 0.0
    %664 = vmatprep.subr.mxu0 0.0
    %665 = vmatpush1.msra.mxu0 0.0
    %666 = vmatprep.subr.mxu0 0.0
    %667 = vmatpush1.msra.mxu0 0.0
    %668 = vmatprep.subr.mxu0 0.0
    %669 = vmatpush1.msra.mxu0 0.0
    %670 = vmatprep.subr.mxu0 0.0
    %671 = vmatpush1.msra.mxu0 0.0
    %672 = vmatprep.subr.mxu0 0.0
    %673 = vmatpush1.msra.mxu0 0.0
    %674 = vmatprep.subr.mxu0 0.0
    %675 = vmatpush1.msra.mxu0 0.0
    %676 = vmatprep.subr.mxu0 0.0
    %677 = vmatpush1.msra.mxu0 0.0
    %678 = vmatprep.subr.mxu0 0.0
    %679 = vmatpush1.msra.mxu0 0.0
    %680 = vmatprep.subr.mxu0 0.0
    %681 = vmatpush1.msra.mxu0 0.0
    %682 = vmatprep.subr.mxu0 0.0
    %683 = vmatpush1.msra.mxu0 0.0
    %684 = vmatprep.subr.mxu0 0.0
    %685 = vmatpush1.msra.mxu0 0.0
    %686 = vmatprep.subr.mxu0 0.0
    %687 = vmatpush1.msra.mxu0 0.0
    %688 = vmatprep.mubr.f32.mxu0 0.0
    %689 = vmatmul.mubr.f32.gmra.mrb[0].mxu0 %v622
    %v690 = vpop.f32.mrb[0].mxu0
    %v691 = vadd.f32 %v618, %v690
    %v692 = vpop.f32.mrb[0].mxu0
    %693 = vdwg.mxu0
    %vm694 = vcmp.lt.s32.totalorder %v30, 4
    %v695 = vsel %vm694, %v691, -1e+30
    %vm696 = vcmask 1041408
    %v697 = vsel %vm696, %v695, -inf
    %698 = vmax.xlane.f32.xlu0 %v697
    %v699 = vpop.xlane.xlu0 %698
    %v700 = vsub.f32 %v695, %v699
    %v701 = vmul.f32 %v700, 1.442695
    %v702 = vpow.pop %v701
    %v703 = vsel %vm696, %v702, 0.0
    %704 = vadd.xlane.f32.xlu0 %v703
    %v705 = vpop.xlane.xlu0 %704
    %v706 = vrcp.pop %v705
    %v707 = vmul.f32 %v702, %v706
    %v709 = vrot.slane %v707, 6
    %v711 = vsel %vm696, %v691, %v709
    %vm712 = vcmask 1043456
    %v713 = vsel %vm712, %v711, 0.0
    %714 = vst [vmem:[%s2] sm:$0xff] %v713
    // Predicated region
    $region14: #{bertcnn_forward.1} parent=1 // pred_check
      _
    $region15: #{bertcnn_forward.1} parent=1 // pred_check_branch
      %716 = sbr.rel (0) target = $region17
    $region16: #{bertcnn_forward.1} parent=1 // pred_region
      _
    $region17: #{bertcnn_forward.1} parent=1 // pred_fallthru
      _
    // Predicated region
    $region18: #{bertcnn_forward.1} parent=1 // pred_check
      _
    $region19: #{bertcnn_forward.1} parent=1 // pred_check_branch
      %718 = sbr.rel (0) target = $region21
    $region20: #{bertcnn_forward.1} parent=1 // pred_region
      _
    $region21: #{bertcnn_forward.1} parent=1 // pred_fallthru
      _
    %719 = vsyncpa [#allocation3], 1

</llo_original>
